<compile_context>
chip_gen: v7x
topology: tpu7x:2x2x1
jax: 0.10.0
libtpu: 0.0.40
codegen_flags: <defaults>
</compile_context>

<pallas_src>
import functools

import jax
import jax.numpy as jnp
from jax import lax
from jax.experimental import pallas as pl
from jax.experimental.pallas import tpu as pltpu

_LANES = 128


def _layernorm_kernel(x_ref, g_ref, b_ref, o_ref, *, n_valid, eps):
    # x_ref / o_ref: (Bt, R, 128) block (Bt samples, flattened features)
    # g_ref / b_ref: (R, 128) per-element affine params (pre-broadcast, f32)
    x = x_ref[...].astype(jnp.float32)           # stats in f32 regardless of I/O dtype
    bt, r, lanes = x.shape
    n_total = r * lanes

    # per-sample mean; padded tail (if any) is zero so the raw sum is exact
    s = jnp.sum(jnp.sum(x, axis=2, keepdims=True), axis=1, keepdims=True)  # (Bt,1,1)
    mean = s / n_valid

    centered = x - mean                           # reused by the normalize below
    sq = centered * centered
    if n_valid != n_total:
        # mask the padded tail out of the variance (padded x is 0, not mean)
        row = lax.broadcasted_iota(jnp.int32, (r, lanes), 0)
        lane = lax.broadcasted_iota(jnp.int32, (r, lanes), 1)
        mask = (row * lanes + lane) < n_valid     # (R, 128), static
        sq = jnp.where(mask[None], sq, 0.0)
    ssq = jnp.sum(jnp.sum(sq, axis=2, keepdims=True), axis=1, keepdims=True)
    var = ssq / (n_valid - 1)                     # unbiased, like torch.std

    # (x - mean) / (std + eps); reciprocal on the EUP slot (per-sample scalar)
    inv = pl.reciprocal(jnp.sqrt(var) + eps, approx=True)   # (Bt,1,1)

    y = (centered * inv) * g_ref[...] + b_ref[...]          # full-vreg VPU work
    o_ref[...] = y.astype(o_ref.dtype)


def _choose_block_batch(batch, per_sample_bytes):
    """Largest divisor of `batch` giving ~<=1 MiB tiles and >=2 grid steps."""
    cap = max(1, (1 << 20) // max(per_sample_bytes, 1))
    if batch >= 2:
        cap = max(1, min(cap, batch // 2))        # keep both v7x TCs busy
    best = 1
    for d in range(1, batch + 1):
        if batch % d == 0 and d <= cap:
            best = d
    return best


def layernorm_pallas(x, gamma, beta, *, eps=1e-5):
    """LayerNorm.forward. x is (B, C, ...) in PyTorch layout."""
    orig_shape = x.shape
    B, C = int(x.shape[0]), int(x.shape[1])
    L = 1
    for d in x.shape[2:]:
        L *= int(d)
    N = C * L
    R = (N + _LANES - 1) // _LANES                # rows per flattened sample
    Np = R * _LANES
    pad = Np - N

    # lane-dense, sublane-full per-sample layout: (B, R, 128)
    xf = x.reshape(B, N)
    if pad:
        xf = jnp.pad(xf, ((0, 0), (0, pad)))
    x3 = xf.reshape(B, R, _LANES)

    # pre-broadcast affine params to the same flattened per-element layout
    g_full = jnp.repeat(gamma.astype(jnp.float32), L)        # (N,) channel-major
    b_full = jnp.repeat(beta.astype(jnp.float32), L)
    if pad:
        g_full = jnp.pad(g_full, (0, pad))
        b_full = jnp.pad(b_full, (0, pad))
    g2 = g_full.reshape(R, _LANES)
    b2 = b_full.reshape(R, _LANES)

    per_sample_bytes = Np * x.dtype.itemsize
    Bt = _choose_block_batch(B, per_sample_bytes)
    grid = (B // Bt,)

    # explicit VMEM budget (double-buffered in+out tiles + params, 2x headroom)
    tile_bytes = Bt * Np * x.dtype.itemsize
    vmem_needed = 2 * (2 * tile_bytes) + 2 * (2 * Np * 4)
    vmem_limit = int(min(64 << 20, max(4 << 20, 2 * vmem_needed)))

    out = pl.pallas_call(
        functools.partial(_layernorm_kernel, n_valid=N, eps=eps),
        out_shape=jax.ShapeDtypeStruct((B, R, _LANES), x.dtype),
        grid_spec=pltpu.PrefetchScalarGridSpec(
            num_scalar_prefetch=0,
            grid=grid,
            in_specs=[
                pl.BlockSpec((Bt, R, _LANES), lambda i: (i, 0, 0)),
                pl.BlockSpec((R, _LANES), lambda i: (0, 0)),
                pl.BlockSpec((R, _LANES), lambda i: (0, 0)),
            ],
            out_specs=pl.BlockSpec((Bt, R, _LANES), lambda i: (i, 0, 0)),
        ),
        compiler_params=pltpu.CompilerParams(
            dimension_semantics=("parallel",),
            vmem_limit_bytes=vmem_limit,
        ),
    )(x3, g2, b2)

    out_flat = out.reshape(B, Np)
    if pad:
        out_flat = out_flat[:, :N]
    return out_flat.reshape(orig_shape)


@jax.jit
def layernorm_forward(x, gamma, beta):
    return layernorm_pallas(x, gamma, beta, eps=1e-5)


# ---------------- pure-JAX reference (for sanity check) ----------------
def _ref_layernorm(x, gamma, beta, eps=1e-5):
    B = x.shape[0]
    xf = x.reshape(B, -1).astype(jnp.float32)
    n = xf.shape[1]
    mean = jnp.mean(xf, axis=1)
    var = jnp.sum((xf - mean[:, None]) ** 2, axis=1) / (n - 1)  # unbiased
    std = jnp.sqrt(var)
    bshape = (B,) + (1,) * (x.ndim - 1)
    y = (x.astype(jnp.float32) - mean.reshape(bshape)) / (std.reshape(bshape) + eps)
    pshape = (1, -1) + (1,) * (x.ndim - 2)
    y = y * gamma.reshape(pshape) + beta.reshape(pshape)
    return y.astype(x.dtype)


if __name__ == "__main__":
    B, C, H, W = 2, 4, 16, 16

    key = jax.random.PRNGKey(0)
    kx, kg = jax.random.split(key)
    x = jax.random.normal(kx, (B, C, H, W), jnp.float32)        # NCHW input
    # Matches the module's init: gamma ~ U[0,1), beta = 0.
    gamma = jax.random.uniform(kg, (C,), jnp.float32)
    beta = jnp.zeros((C,), jnp.float32)

    out = layernorm_forward(x, gamma, beta)
    out = jax.block_until_ready(out)
    ref = _ref_layernorm(x, gamma, beta)
    assert out.shape == (B, C, H, W)
    assert jnp.allclose(out, ref, rtol=1e-3, atol=1e-3), (
        float(jnp.max(jnp.abs(out - ref))))

    # B == 1 path (module's global-stats branch; identical numerics)
    x1 = x[:1]
    out1 = jax.block_until_ready(layernorm_forward(x1, gamma, beta))
    ref1 = _ref_layernorm(x1, gamma, beta)
    assert jnp.allclose(out1, ref1, rtol=1e-3, atol=1e-3), (
        float(jnp.max(jnp.abs(out1 - ref1))))

    print("KERNEL_OK")
</pallas_src>

<mosaic_0001>
module attributes {stable_mosaic.version = 11 : i64} {
  func.func @_layernorm_kernel(%arg0: i32, %arg1: memref<1x8x128xf32, #tpu.memory_space<vmem>>, %arg2: memref<8x128xf32, #tpu.memory_space<vmem>>, %arg3: memref<8x128xf32, #tpu.memory_space<vmem>>, %arg4: memref<1x8x128xf32, #tpu.memory_space<vmem>>) attributes {dimension_semantics = [#tpu.dimension_semantics<parallel>], iteration_bounds = array<i64: 2>, scalar_prefetch = 0 : i64, scratch_operands = 0 : i64, tpu.core_type = #tpu.core_type<tc>, window_params = [{transform_indices = @transform_0, window_bounds = array<i64: 1, 8, 128>}, {pipeline_mode = #tpu.pipeline_mode<synchronous>, transform_indices = @transform_1, window_bounds = array<i64: 8, 128>}, {pipeline_mode = #tpu.pipeline_mode<synchronous>, transform_indices = @transform_2, window_bounds = array<i64: 8, 128>}, {transform_indices = @transform_3, window_bounds = array<i64: 1, 8, 128>}]} {
    %c0 = arith.constant 0 : index
    %c0_0 = arith.constant 0 : index
    %c0_1 = arith.constant 0 : index
    %0 = vector.load %arg1[%c0, %c0_0, %c0_1] : memref<1x8x128xf32, #tpu.memory_space<vmem>>, vector<1x8x128xf32>
    %cst = arith.constant dense<0.000000e+00> : vector<1x8xf32>
    %1 = vector.multi_reduction <add>, %0, %cst [2] : vector<1x8x128xf32> to vector<1x8xf32>
    %2 = vector.shape_cast %1 : vector<1x8xf32> to vector<1x8x1xf32>
    %cst_2 = arith.constant dense<0.000000e+00> : vector<1x1xf32>
    %3 = vector.multi_reduction <add>, %2, %cst_2 [1] : vector<1x8x1xf32> to vector<1x1xf32>
    %4 = vector.shape_cast %3 : vector<1x1xf32> to vector<1x1x1xf32>
    %cst_3 = arith.constant 1.024000e+03 : f32
    %5 = vector.broadcast %cst_3 : f32 to vector<1x1x1xf32>
    %6 = arith.divf %4, %5 : vector<1x1x1xf32>
    %7 = vector.broadcast %6 : vector<1x1x1xf32> to vector<1x8x128xf32>
    %8 = arith.subf %0, %7 : vector<1x8x128xf32>
    %9 = arith.mulf %8, %8 : vector<1x8x128xf32>
    %cst_4 = arith.constant dense<0.000000e+00> : vector<1x8xf32>
    %10 = vector.multi_reduction <add>, %9, %cst_4 [2] : vector<1x8x128xf32> to vector<1x8xf32>
    %11 = vector.shape_cast %10 : vector<1x8xf32> to vector<1x8x1xf32>
    %cst_5 = arith.constant dense<0.000000e+00> : vector<1x1xf32>
    %12 = vector.multi_reduction <add>, %11, %cst_5 [1] : vector<1x8x1xf32> to vector<1x1xf32>
    %13 = vector.shape_cast %12 : vector<1x1xf32> to vector<1x1x1xf32>
    %cst_6 = arith.constant 1.023000e+03 : f32
    %14 = vector.broadcast %cst_6 : f32 to vector<1x1x1xf32>
    %15 = arith.divf %13, %14 : vector<1x1x1xf32>
    %16 = math.sqrt %15 : vector<1x1x1xf32>
    %cst_7 = arith.constant 9.99999974E-6 : f32
    %17 = vector.broadcast %cst_7 : f32 to vector<1x1x1xf32>
    %18 = arith.addf %16, %17 : vector<1x1x1xf32>
    %19 = tpu.reciprocal %18 {approx = true} : vector<1x1x1xf32> -> vector<1x1x1xf32>
    %20 = vector.broadcast %19 : vector<1x1x1xf32> to vector<1x8x128xf32>
    %21 = arith.mulf %8, %20 : vector<1x8x128xf32>
    %c0_8 = arith.constant 0 : index
    %c0_9 = arith.constant 0 : index
    %22 = vector.load %arg2[%c0_8, %c0_9] : memref<8x128xf32, #tpu.memory_space<vmem>>, vector<8x128xf32>
    %23 = vector.shape_cast %22 : vector<8x128xf32> to vector<1x8x128xf32>
    %24 = arith.mulf %21, %23 : vector<1x8x128xf32>
    %c0_10 = arith.constant 0 : index
    %c0_11 = arith.constant 0 : index
    %25 = vector.load %arg3[%c0_10, %c0_11] : memref<8x128xf32, #tpu.memory_space<vmem>>, vector<8x128xf32>
    %26 = vector.shape_cast %25 : vector<8x128xf32> to vector<1x8x128xf32>
    %27 = arith.addf %24, %26 : vector<1x8x128xf32>
    %c0_12 = arith.constant 0 : index
    %c0_13 = arith.constant 0 : index
    %c0_14 = arith.constant 0 : index
    %28 = vector.load %arg4[%c0_12, %c0_13, %c0_14] : memref<1x8x128xf32, #tpu.memory_space<vmem>>, vector<1x8x128xf32>
    tpu.vector_store %arg4[%c0_12, %c0_13, %c0_14], %27 {strides = array<i32>} : memref<1x8x128xf32, #tpu.memory_space<vmem>>, vector<1x8x128xf32>,
    return
  }
  func.func @transform_0(%arg0: i32) -> (i32, i32, i32) {
    %c0_i32 = arith.constant 0 : i32
    %c0_i32_0 = arith.constant 0 : i32
    %c0_i32_1 = arith.constant 0 : i32
    return %arg0, %c0_i32, %c0_i32_0 : i32, i32, i32
  }
  func.func @transform_1(%arg0: i32) -> (i32, i32) {
    %c0_i32 = arith.constant 0 : i32
    %c0_i32_0 = arith.constant 0 : i32
    %c0_i32_1 = arith.constant 0 : i32
    return %c0_i32, %c0_i32_0 : i32, i32
  }
  func.func @transform_2(%arg0: i32) -> (i32, i32) {
    %c0_i32 = arith.constant 0 : i32
    %c0_i32_0 = arith.constant 0 : i32
    %c0_i32_1 = arith.constant 0 : i32
    return %c0_i32, %c0_i32_0 : i32, i32
  }
  func.func @transform_3(%arg0: i32) -> (i32, i32, i32) {
    %c0_i32 = arith.constant 0 : i32
    %c0_i32_0 = arith.constant 0 : i32
    %c0_i32_1 = arith.constant 0 : i32
    return %arg0, %c0_i32, %c0_i32_0 : i32, i32, i32
  }
}

</mosaic_0001>

<llo_original>
// kernel: layernorm_forward.1
$region0: #{layernorm_forward.1}
  #allocation0 [shape = 'u32[]', space=smem, size = 0x4, offset = 0x4, fixed_abs, tag = 'smem constant byte address 0x4 - core index']
  #allocation1 [shape = 'u32[144,128]{1,0:T(1,128)}', space=vmem, size = 0x12000, scoped, tag = 'internal scratch']
  %s0 = inlined_call_operand.vmem [shape: f32[2,8,128], index: 0, kind: input, shape index: {}]
  %s1 = inlined_call_operand.vmem [shape: f32[8,128], index: 1, kind: input, shape index: {}]
  %s2 = inlined_call_operand.vmem [shape: f32[8,128], index: 2, kind: input, shape index: {}]
  %s3 = inlined_call_operand.vmem [shape: f32[2,8,128], index: 3, kind: output, shape index: {}]
  %s4 = sld [smem:[#allocation0]]
  $region45: #{layernorm_forward.1} parent=0
    _
  %s6 = ssub.s32 1, %s4
  %s7 = scalar_select 0, %s6, %s4
  loop: start=0, step=1, limit=4
  $region2: #{layernorm_forward.1} parent=0 // loop_pre_header
    _
  $region3: #{layernorm_forward.1} parent=0 // loop_header
    %s9 = sphi 0, %s13
    %p10 = scmp.ge.s32.totalorder %s9, 4
    %s19 = sphi 0, %s21
    %s22 = sphi 0, %s19
    %s23 = sphi 0, %s22
    %s39 = sphi 0, %s23
    %s43 = sphi 0, %s43
    %s45 = sphi 0, %s43
    %s46 = sphi 0, %s45
    %s60 = sphi 0, %s46
    %s64 = sphi 0, %s64
    %s66 = sphi 0, %s64
    %s67 = sphi 0, %s66
    %s81 = sphi 0, %s67
    %s87 = sphi 0, %s89
    %s90 = sphi 0, %s87
    %s91 = sphi 0, %s90
    %s107 = sphi 0, %s91
  $region4: #{layernorm_forward.1} parent=0 // loop_header_branch
    %12 = sbr.rel (%p10) target = $region8
  $region5: #{layernorm_forward.1} parent=0 // loop_body
    %s14 = ssub.s32 %s9, 1
    %s15 = ssub.s32 %s9, 2
    %s16 = sadd.s32 %s9, 1
    %s17 = ssub.s32 %s9, %s16
    %p18 = scmp.eq.s32.totalorder %s17, 0
    %s20 = sadd.s32 %s19, 1
    %s21 = scalar_select %p18, %s19, %s20
    %p24 = pneg %p18
    %p25 = scmp.eq.s32.totalorder %s9, 1
    %p26 = por %p24, %p25
    %p27 = scmp.ne.s32.totalorder %s19, %s22
    %p28 = scmp.eq.s32.totalorder %s9, 0
    %p29 = por %p27, %p28
    %p30 = scmp.ne.s32.totalorder %s19, %s22
    %p31 = scmp.eq.s32.totalorder %s14, 1
    %p32 = por %p30, %p31
    %p33 = scmp.ne.s32.totalorder %s22, %s23
    %p34 = scmp.eq.s32.totalorder %s14, 0
    %p35 = por %p33, %p34
    %p36 = scmp.ne.s32.totalorder %s22, %s23
    %p37 = scmp.eq.s32.totalorder %s15, 1
    %p38 = por %p36, %p37
    %p40 = scmp.ne.s32.totalorder %s23, %s39
    %p41 = scmp.eq.s32.totalorder %s15, 0
    %p42 = por %p40, %p41
    %s44 = sadd.s32 %s43, 1
    %p47 = scmp.eq.s32.totalorder %s9, 1
    %p48 = scmp.ne.s32.totalorder %s43, %s45
    %p49 = scmp.eq.s32.totalorder %s9, 0
    %p50 = por %p48, %p49
    %p51 = scmp.ne.s32.totalorder %s43, %s45
    %p52 = scmp.eq.s32.totalorder %s14, 1
    %p53 = por %p51, %p52
    %p54 = scmp.ne.s32.totalorder %s45, %s46
    %p55 = scmp.eq.s32.totalorder %s14, 0
    %p56 = por %p54, %p55
    %p57 = scmp.ne.s32.totalorder %s45, %s46
    %p58 = scmp.eq.s32.totalorder %s15, 1
    %p59 = por %p57, %p58
    %p61 = scmp.ne.s32.totalorder %s46, %s60
    %p62 = scmp.eq.s32.totalorder %s15, 0
    %p63 = por %p61, %p62
    %s65 = sadd.s32 %s64, 1
    %p68 = scmp.eq.s32.totalorder %s9, 1
    %p69 = scmp.ne.s32.totalorder %s64, %s66
    %p70 = scmp.eq.s32.totalorder %s9, 0
    %p71 = por %p69, %p70
    %p72 = scmp.ne.s32.totalorder %s64, %s66
    %p73 = scmp.eq.s32.totalorder %s14, 1
    %p74 = por %p72, %p73
    %p75 = scmp.ne.s32.totalorder %s66, %s67
    %p76 = scmp.eq.s32.totalorder %s14, 0
    %p77 = por %p75, %p76
    %p78 = scmp.ne.s32.totalorder %s66, %s67
    %p79 = scmp.eq.s32.totalorder %s15, 1
    %p80 = por %p78, %p79
    %p82 = scmp.ne.s32.totalorder %s67, %s81
    %p83 = scmp.eq.s32.totalorder %s15, 0
    %p84 = por %p82, %p83
    %s85 = ssub.s32 %s9, %s16
    %p86 = scmp.eq.s32.totalorder %s85, 0
    %s88 = sadd.s32 %s87, 1
    %s89 = scalar_select %p86, %s87, %s88
    %p92 = pneg %p86
    %p93 = scmp.eq.s32.totalorder %s9, 1
    %p94 = por %p92, %p93
    %p95 = scmp.ne.s32.totalorder %s87, %s90
    %p96 = scmp.eq.s32.totalorder %s9, 0
    %p97 = por %p95, %p96
    %p98 = scmp.ne.s32.totalorder %s87, %s90
    %p99 = scmp.eq.s32.totalorder %s14, 1
    %p100 = por %p98, %p99
    %p101 = scmp.ne.s32.totalorder %s90, %s91
    %p102 = scmp.eq.s32.totalorder %s14, 0
    %p103 = por %p101, %p102
    %p104 = scmp.ne.s32.totalorder %s90, %s91
    %p105 = scmp.eq.s32.totalorder %s15, 1
    %p106 = por %p104, %p105
    %p108 = scmp.ne.s32.totalorder %s91, %s107
    %p109 = scmp.eq.s32.totalorder %s15, 0
    %p110 = por %p108, %p109
    %p111 = scmp.le.s32.totalorder 1, %s9
    %p112 = scmp.lt.s32.totalorder %s9, 3
    %p113 = pnand %p111, %p112
    %p114 = pneg %p113
    // Predicated region
    $region9: #{layernorm_forward.1} parent=5 // pred_check
      _
    $region10: #{layernorm_forward.1} parent=5 // pred_check_branch
      %116 = sbr.rel (%p113) target = $region12
    $region11: #{layernorm_forward.1} parent=5 // pred_region
      %s117 = ssub.s32 %s9, 1
      // Predicated region
      $region13: #{layernorm_forward.1} parent=11 // pred_check
        %p118 = pneg %p56
      $region14: #{layernorm_forward.1} parent=11 // pred_check_branch
        %120 = sbr.rel (%p118) target = $region16
      $region15: #{layernorm_forward.1} parent=11 // pred_region
        _
      $region16: #{layernorm_forward.1} parent=11 // pred_fallthru
        _
      // Predicated region
      $region17: #{layernorm_forward.1} parent=11 // pred_check
        %p121 = pneg %p77
      $region18: #{layernorm_forward.1} parent=11 // pred_check_branch
        %123 = sbr.rel (%p121) target = $region20
      $region19: #{layernorm_forward.1} parent=11 // pred_region
        _
      $region20: #{layernorm_forward.1} parent=11 // pred_fallthru
        _
    $region12: #{layernorm_forward.1} parent=5 // pred_fallthru
      _
    %p124 = scmp.lt.s32.totalorder %s9, 2
    // Predicated region
    $region21: #{layernorm_forward.1} parent=5 // pred_check
      %p125 = pneg %p124
    $region22: #{layernorm_forward.1} parent=5 // pred_check_branch
      %127 = sbr.rel (%p125) target = $region24
    $region23: #{layernorm_forward.1} parent=5 // pred_region
      // Predicated region
      $region25: #{layernorm_forward.1} parent=23 // pred_check
        %p128 = pneg %p29
      $region26: #{layernorm_forward.1} parent=23 // pred_check_branch
        %130 = sbr.rel (%p128) target = $region28
      $region27: #{layernorm_forward.1} parent=23 // pred_region
        %p131 = scmp.lt.s32.totalorder %s9, 1
        %s132 = scalar_select %p131, %s9, 1
        %s133 = smul.addr %s132, 8
        %s134 = scalar_lea.vmem %s0, %s133
      $region28: #{layernorm_forward.1} parent=23 // pred_fallthru
        _
    $region24: #{layernorm_forward.1} parent=5 // pred_fallthru
      _
    %p135 = scmp.le.s32.totalorder 1, %s9
    %p136 = scmp.lt.s32.totalorder %s9, 3
    %p137 = pnand %p135, %p136
    %p138 = pneg %p137
    // Predicated region
    $region29: #{layernorm_forward.1} parent=5 // pred_check
      _
    $region30: #{layernorm_forward.1} parent=5 // pred_check_branch
      %140 = sbr.rel (%p137) target = $region32
    $region31: #{layernorm_forward.1} parent=5 // pred_region
      %s141 = ssub.s32 %s9, 1
      %p142 = scmp.lt.s32.totalorder %s14, 1
      %s143 = scalar_select %p142, %s14, 1
      %s144 = smul.addr %s143, 8
      %s145 = scalar_lea.vmem %s0, %s144
      %p146 = pneg %p35
      %p147 = pneg %p32
      %p148 = pneg %p56
      %p149 = pneg %p53
      %p150 = pneg %p77
      %p151 = pneg %p74
      %p152 = pneg %p103
      %p153 = pneg %p100
      %p154 = scmp.lt.s32.totalorder %s14, 1
      %s155 = scalar_select %p154, %s14, 1
      %s156 = smul.addr %s155, 8
      %s157 = scalar_lea.vmem %s3, %s156
      %p158 = scmp.lt.s32.totalorder %s14, 1
      %s159 = scalar_select %p158, %s14, 1
      %s160 = smul.addr %s159, 8
      %s161 = scalar_lea.vmem %s0, %s160
      %p162 = scmp.lt.s32.totalorder %s14, 1
      %s163 = scalar_select %p162, %s14, 1
      %s164 = smul.addr %s163, 8
      %s165 = scalar_lea.vmem %s3, %s164
      %v166 = vld [vmem:[%s161] sm:$0xff]
      %167 = vadd.xlane.f32.xlu0 %v166
      %v168 = vpop.xlane.xlu0 %167
      %v169 = vrot.slane %v168, 4
      %v170 = vadd.f32 %v168, %v169
      %v171 = vrot.slane %v170, 2
      %v172 = vadd.f32 %v170, %v171
      %v173 = vrot.slane %v172, 1
      %v174 = vadd.f32 %v172, %v173
      %v175 = vrcp.pop 1024.0
      %v176 = vmul.f32 %v174, %v175
      %v177 = vsub.f32 %v166, %v176
      %v178 = vmul.f32 %v177, %v177
      %179 = vadd.xlane.f32.xlu0 %v178
      %v180 = vpop.xlane.xlu0 %179
      %v181 = vrot.slane %v180, 4
      %v182 = vadd.f32 %v180, %v181
      %v183 = vrot.slane %v182, 2
      %v184 = vadd.f32 %v182, %v183
      %v185 = vrot.slane %v184, 1
      %v186 = vadd.f32 %v184, %v185
      %v187 = vrcp.pop 1023.0
      %v188 = vmul.f32 %v186, %v187
      %v189 = vrsqrt.pop %v188
      %v190 = vmul.f32 %v188, %v189
      %vm191 = vcmp.eq.f32.partialorder %v188, inf
      %v192 = vsel %vm191, %v188, %v190
      %vm193 = vcmp.eq.f32.partialorder %v188, 0.0
      %v194 = vand.u32 %v188, 2147483648
      %v195 = vsel %vm193, %v194, %v192
      %v196 = vadd.f32 %v195, 1e-05
      %v197 = vrcp.pop %v196
      %v198 = vmul.f32 %v177, %v197
      %v199 = vld [vmem:[%s1] sm:$0xff]
      %v200 = vmul.f32 %v198, %v199
      %v201 = vld [vmem:[%s2] sm:$0xff]
      %v202 = vadd.f32 %v200, %v201
      %203 = vst [vmem:[%s165] sm:$0xff] %v202
      %p204 = scmp.lt.s32.totalorder %s14, 1
      %s205 = scalar_select %p204, %s14, 1
      %s206 = smul.addr %s205, 8
      %s207 = scalar_lea.vmem %s3, %s206
      // Predicated region
      $region33: #{layernorm_forward.1} parent=31 // pred_check
        %p208 = pneg %p100
      $region34: #{layernorm_forward.1} parent=31 // pred_check_branch
        %210 = sbr.rel (%p208) target = $region36
      $region35: #{layernorm_forward.1} parent=31 // pred_region
        _
      $region36: #{layernorm_forward.1} parent=31 // pred_fallthru
        _
    $region32: #{layernorm_forward.1} parent=5 // pred_fallthru
      _
    %p211 = scmp.le.s32.totalorder 2, %s9
    // Predicated region
    $region37: #{layernorm_forward.1} parent=5 // pred_check
      %p212 = pneg %p211
    $region38: #{layernorm_forward.1} parent=5 // pred_check_branch
      %214 = sbr.rel (%p212) target = $region40
    $region39: #{layernorm_forward.1} parent=5 // pred_region
      %s215 = ssub.s32 %s9, 2
      // Predicated region
      $region41: #{layernorm_forward.1} parent=39 // pred_check
        %p216 = pneg %p106
      $region42: #{layernorm_forward.1} parent=39 // pred_check_branch
        %218 = sbr.rel (%p216) target = $region44
      $region43: #{layernorm_forward.1} parent=39 // pred_region
        %p219 = scmp.lt.s32.totalorder %s15, 1
        %s220 = scalar_select %p219, %s15, 1
        %s221 = smul.addr %s220, 8
        %s222 = scalar_lea.vmem %s3, %s221
      $region44: #{layernorm_forward.1} parent=39 // pred_fallthru
        _
    $region40: #{layernorm_forward.1} parent=5 // pred_fallthru
      _
  $region6: #{layernorm_forward.1} parent=0 // loop_footer
    %s13 = sadd.s32 1, %s9
  $region7: #{layernorm_forward.1} parent=0 // loop_footer_branch
    %8 = sbr.rel target = $region3
  $region8: #{layernorm_forward.1} parent=0 // loop_exit
    _

</llo_original>
